<compile_context>
chip_gen: v5e
topology: v5e:2x2
jax: 0.10.0
libtpu: 0.0.40
codegen_flags: <defaults>
</compile_context>

<pallas_src>
import functools

import jax
import jax.numpy as jnp
from jax import lax
from jax.experimental import pallas as pl
from jax.experimental.pallas import tpu as pltpu


_GROUP = 8  # sublane group: one dense (8, D) f32 store per group


def _embedding_kernel(ids_ref, seed_ref, tok_ref, pos_ref, out_ref,
                      *, drop_prob, seq_len, ts):
    """One grid step = one (batch row, sequence tile).

    ids_ref : SMEM [B*S] int32   (scalar-prefetched, flattened token ids)
    seed_ref: SMEM [1]   int32   (scalar-prefetched dropout seed)
    tok_ref : VMEM [V, D] f32    (token embedding table, fetched once)
    pos_ref : VMEM [TS, D] f32   (positional encodings for this sequence tile)
    out_ref : VMEM [1, TS, D] f32
    """
    b = pl.program_id(0)
    st = pl.program_id(1)
    D = out_ref.shape[2]
    n_groups = ts // _GROUP

    # Global flat row offset of the first row handled by this grid step.
    row0 = b * seq_len + st * ts

    seed_u = seed_ref[0].astype(jnp.uint32)
    keep_threshold = int(round(drop_prob * (1 << 24)))  # static
    scale = 1.0 / (1.0 - drop_prob) if drop_prob > 0.0 else 1.0

    def group_body(g, carry):
        base = g * _GROUP  # local row offset within this sequence tile

        # Gather 8 embedding rows (dynamic sublane slices of the VMEM table).
        rows = []
        for r in range(_GROUP):
            tok_id = ids_ref[row0 + base + r]
            rows.append(tok_ref[pl.ds(tok_id, 1), :])
        tile8 = jnp.concatenate(rows, axis=0)  # (8, D)

        # Add positional encoding for these 8 positions.
        tile8 = tile8 + pos_ref[pl.ds(base, _GROUP), :]

        # Fused inverted dropout (training semantics), stateless hash PRNG.
        if drop_prob > 0.0:
            ridx = lax.broadcasted_iota(jnp.int32, (_GROUP, D), 0) + (row0 + base)
            cidx = lax.broadcasted_iota(jnp.int32, (_GROUP, D), 1)
            flat = ridx * D + cidx                       # unique per element
            x = flat.astype(jnp.uint32) ^ (seed_u * jnp.uint32(0x9E3779B9))
            # splitmix32-style finalizer
            x = x ^ (x >> 16)
            x = x * jnp.uint32(0x7FEB352D)
            x = x ^ (x >> 15)
            x = x * jnp.uint32(0x846CA68B)
            x = x ^ (x >> 16)
            r24 = (x >> 8).astype(jnp.int32)             # uniform in [0, 2^24)
            keep = r24 >= jnp.int32(keep_threshold)
            tile8 = jnp.where(keep, tile8 * jnp.float32(scale), jnp.float32(0.0))

        # One dense (8, D) store; no re-read of the output tile.
        out_ref[0, pl.ds(base, _GROUP), :] = tile8
        return carry

    unroll = n_groups if n_groups <= 8 else 8
    lax.fori_loop(0, n_groups, group_body, 0, unroll=unroll)


def transformer_embedding(ids, seed, tok_table, pos_table, *, drop_prob):
    """ids: [B, S] int32, tok_table: [V, D] f32, pos_table: [max_len, D] f32."""
    B, S = ids.shape
    V, D = tok_table.shape
    assert S % _GROUP == 0, "sequence length must be a multiple of 8"

    # Sequence tile size: up to 256 rows, multiple of 8, divides S.
    ts = min(S, 256)
    while S % ts != 0:
        ts -= _GROUP
    n_s_tiles = S // ts

    pos = pos_table[:S, :]          # slice PE to sequence length (setup glue)
    ids_flat = ids.reshape(-1)      # 1-D SMEM prefetch (avoids 2-D SMEM padding)

    kernel = functools.partial(_embedding_kernel,
                               drop_prob=drop_prob, seq_len=S, ts=ts)

    cost = pl.CostEstimate(
        flops=B * S * D,
        transcendentals=0,
        bytes_accessed=2 * B * S * D * 4 + S * D * 4 + B * S * 4,
    )

    return pl.pallas_call(
        kernel,
        out_shape=jax.ShapeDtypeStruct((B, S, D), jnp.float32),
        grid_spec=pltpu.PrefetchScalarGridSpec(
            num_scalar_prefetch=2,  # ids_flat, seed -> SMEM
            grid=(B, n_s_tiles),
            in_specs=[
                # Token table: constant block index -> DMA'd once, stays resident.
                pl.BlockSpec((V, D), lambda b, st, ids_r, seed_r: (0, 0)),
                # Positional encodings: tiled along the sequence axis.
                pl.BlockSpec((ts, D), lambda b, st, ids_r, seed_r: (st, 0)),
            ],
            out_specs=pl.BlockSpec((1, ts, D),
                                   lambda b, st, ids_r, seed_r: (b, st, 0)),
        ),
        compiler_params=pltpu.CompilerParams(
            dimension_semantics=("parallel", "parallel"),
        ),
        cost_estimate=cost,
    )(ids_flat, seed, tok_table, pos)


def make_positional_encoding(max_len, d_model):
    """Standard sinusoidal positional encoding [max_len, d_model] (setup glue)."""
    pos = jnp.arange(max_len, dtype=jnp.float32)[:, None]        # [L, 1]
    i = jnp.arange(0, d_model, 2, dtype=jnp.float32)[None, :]    # [1, D/2]
    div = jnp.exp(-jnp.log(10000.0) * i / d_model)               # 10000^(-2i/d)
    pe = jnp.zeros((max_len, d_model), dtype=jnp.float32)
    pe = pe.at[:, 0::2].set(jnp.sin(pos * div))
    pe = pe.at[:, 1::2].set(jnp.cos(pos * div))
    return pe


if __name__ == "__main__":
    # Small deterministic shapes consistent with the module.
    vocab_size = 32
    d_model = 128      # multiple of 128 -> lane-dense stores
    max_len = 16
    drop_prob = 0.1
    B, S = 2, 8

    key = jax.random.PRNGKey(0)
    k_ids, k_emb = jax.random.split(key)

    tok_table = jax.random.normal(k_emb, (vocab_size, d_model), dtype=jnp.float32)
    pos_table = make_positional_encoding(max_len, d_model)

    ids = jax.random.randint(k_ids, (B, S), 0, vocab_size, dtype=jnp.int32)
    seed = jnp.array([0], dtype=jnp.int32)

    # Sanity check of gather + PE (dropout disabled) against plain JAX.
    out_nodrop = transformer_embedding(ids, seed, tok_table, pos_table, drop_prob=0.0)
    ref = tok_table[ids] + pos_table[:S][None, :, :]
    assert jnp.allclose(out_nodrop, ref, atol=1e-5, rtol=1e-5)

    # Full forward (training semantics: dropout applied).
    out = transformer_embedding(ids, seed, tok_table, pos_table, drop_prob=drop_prob)
    out = jax.block_until_ready(out)

    assert out.shape == (B, S, d_model)
    assert out.dtype == jnp.float32
    print("KERNEL_OK")
</pallas_src>

<mosaic_0001>
module attributes {stable_mosaic.version = 11 : i64} {
  func.func @_embedding_kernel(%arg0: i32, %arg1: i32, %arg2: memref<16xi32, #tpu.memory_space<smem>>, %arg3: memref<1xi32, #tpu.memory_space<smem>>, %arg4: memref<32x128xf32, #tpu.memory_space<vmem>>, %arg5: memref<8x128xf32, #tpu.memory_space<vmem>>, %arg6: memref<1x8x128xf32, #tpu.memory_space<vmem>>) attributes {dimension_semantics = [#tpu.dimension_semantics<parallel>, #tpu.dimension_semantics<parallel>], iteration_bounds = array<i64: 2, 1>, scalar_prefetch = 2 : i64, scratch_operands = 0 : i64, tpu.core_type = #tpu.core_type<tc>, window_params = [{pipeline_mode = #tpu.pipeline_mode<synchronous>, transform_indices = @transform_0, window_bounds = array<i64: 32, 128>}, {transform_indices = @transform_1, window_bounds = array<i64: 8, 128>}, {transform_indices = @transform_2, window_bounds = array<i64: 1, 8, 128>}]} {
    %c8_i32 = arith.constant 8 : i32
    %0 = arith.muli %arg0, %c8_i32 : i32
    %c8_i32_0 = arith.constant 8 : i32
    %1 = arith.muli %arg1, %c8_i32_0 : i32
    %2 = arith.addi %0, %1 : i32
    %c0_i32 = arith.constant 0 : i32
    %c8_i32_1 = arith.constant 8 : i32
    %3 = arith.muli %c0_i32, %c8_i32_1 : i32
    %4 = arith.addi %2, %3 : i32
    %c0_i32_2 = arith.constant 0 : i32
    %5 = arith.addi %4, %c0_i32_2 : i32
    %6 = arith.index_cast %5 : i32 to index
    %7 = memref.load %arg2[%6] : memref<16xi32, #tpu.memory_space<smem>>
    %8 = arith.index_cast %7 : i32 to index
    %c0 = arith.constant 0 : index
    %9 = vector.load %arg4[%8, %c0] : memref<32x128xf32, #tpu.memory_space<vmem>>, vector<1x128xf32>
    %10 = arith.addi %2, %3 : i32
    %c1_i32 = arith.constant 1 : i32
    %11 = arith.addi %10, %c1_i32 : i32
    %12 = arith.index_cast %11 : i32 to index
    %13 = memref.load %arg2[%12] : memref<16xi32, #tpu.memory_space<smem>>
    %14 = arith.index_cast %13 : i32 to index
    %c0_3 = arith.constant 0 : index
    %15 = vector.load %arg4[%14, %c0_3] : memref<32x128xf32, #tpu.memory_space<vmem>>, vector<1x128xf32>
    %16 = arith.addi %2, %3 : i32
    %c2_i32 = arith.constant 2 : i32
    %17 = arith.addi %16, %c2_i32 : i32
    %18 = arith.index_cast %17 : i32 to index
    %19 = memref.load %arg2[%18] : memref<16xi32, #tpu.memory_space<smem>>
    %20 = arith.index_cast %19 : i32 to index
    %c0_4 = arith.constant 0 : index
    %21 = vector.load %arg4[%20, %c0_4] : memref<32x128xf32, #tpu.memory_space<vmem>>, vector<1x128xf32>
    %22 = arith.addi %2, %3 : i32
    %c3_i32 = arith.constant 3 : i32
    %23 = arith.addi %22, %c3_i32 : i32
    %24 = arith.index_cast %23 : i32 to index
    %25 = memref.load %arg2[%24] : memref<16xi32, #tpu.memory_space<smem>>
    %26 = arith.index_cast %25 : i32 to index
    %c0_5 = arith.constant 0 : index
    %27 = vector.load %arg4[%26, %c0_5] : memref<32x128xf32, #tpu.memory_space<vmem>>, vector<1x128xf32>
    %28 = arith.addi %2, %3 : i32
    %c4_i32 = arith.constant 4 : i32
    %29 = arith.addi %28, %c4_i32 : i32
    %30 = arith.index_cast %29 : i32 to index
    %31 = memref.load %arg2[%30] : memref<16xi32, #tpu.memory_space<smem>>
    %32 = arith.index_cast %31 : i32 to index
    %c0_6 = arith.constant 0 : index
    %33 = vector.load %arg4[%32, %c0_6] : memref<32x128xf32, #tpu.memory_space<vmem>>, vector<1x128xf32>
    %34 = arith.addi %2, %3 : i32
    %c5_i32 = arith.constant 5 : i32
    %35 = arith.addi %34, %c5_i32 : i32
    %36 = arith.index_cast %35 : i32 to index
    %37 = memref.load %arg2[%36] : memref<16xi32, #tpu.memory_space<smem>>
    %38 = arith.index_cast %37 : i32 to index
    %c0_7 = arith.constant 0 : index
    %39 = vector.load %arg4[%38, %c0_7] : memref<32x128xf32, #tpu.memory_space<vmem>>, vector<1x128xf32>
    %40 = arith.addi %2, %3 : i32
    %c6_i32 = arith.constant 6 : i32
    %41 = arith.addi %40, %c6_i32 : i32
    %42 = arith.index_cast %41 : i32 to index
    %43 = memref.load %arg2[%42] : memref<16xi32, #tpu.memory_space<smem>>
    %44 = arith.index_cast %43 : i32 to index
    %c0_8 = arith.constant 0 : index
    %45 = vector.load %arg4[%44, %c0_8] : memref<32x128xf32, #tpu.memory_space<vmem>>, vector<1x128xf32>
    %46 = arith.addi %2, %3 : i32
    %c7_i32 = arith.constant 7 : i32
    %47 = arith.addi %46, %c7_i32 : i32
    %48 = arith.index_cast %47 : i32 to index
    %49 = memref.load %arg2[%48] : memref<16xi32, #tpu.memory_space<smem>>
    %50 = arith.index_cast %49 : i32 to index
    %c0_9 = arith.constant 0 : index
    %51 = vector.load %arg4[%50, %c0_9] : memref<32x128xf32, #tpu.memory_space<vmem>>, vector<1x128xf32>
    %52 = tpu.concatenate %9, %15, %21, %27, %33, %39, %45, %51 in 0 : vector<1x128xf32>, vector<1x128xf32>, vector<1x128xf32>, vector<1x128xf32>, vector<1x128xf32>, vector<1x128xf32>, vector<1x128xf32>, vector<1x128xf32> -> vector<8x128xf32>
    %53 = arith.index_cast %3 : i32 to index
    %c0_10 = arith.constant 0 : index
    %54 = vector.load %arg5[%53, %c0_10] : memref<8x128xf32, #tpu.memory_space<vmem>>, vector<8x128xf32>
    %55 = arith.addf %52, %54 : vector<8x128xf32>
    %c0_11 = arith.constant 0 : index
    %56 = arith.index_cast %3 : i32 to index
    %c0_12 = arith.constant 0 : index
    %57 = vector.load %arg6[%c0_11, %56, %c0_12] : memref<1x8x128xf32, #tpu.memory_space<vmem>>, vector<1x8x128xf32>
    %58 = vector.shape_cast %57 : vector<1x8x128xf32> to vector<8x128xf32>
    %59 = vector.shape_cast %55 : vector<8x128xf32> to vector<1x8x128xf32>
    tpu.vector_store %arg6[%c0_11, %56, %c0_12], %59 {strides = array<i32>} : memref<1x8x128xf32, #tpu.memory_space<vmem>>, vector<1x8x128xf32>,
    %c1_i32_13 = arith.constant 1 : i32
    return
  }
  func.func @transform_0(%arg0: i32, %arg1: i32, %arg2: memref<16xi32, #tpu.memory_space<smem>>, %arg3: memref<1xi32, #tpu.memory_space<smem>>) -> (i32, i32) {
    %c0_i32 = arith.constant 0 : i32
    %c0_i32_0 = arith.constant 0 : i32
    %c0_i32_1 = arith.constant 0 : i32
    return %c0_i32, %c0_i32_0 : i32, i32
  }
  func.func @transform_1(%arg0: i32, %arg1: i32, %arg2: memref<16xi32, #tpu.memory_space<smem>>, %arg3: memref<1xi32, #tpu.memory_space<smem>>) -> (i32, i32) {
    %c0_i32 = arith.constant 0 : i32
    %c0_i32_0 = arith.constant 0 : i32
    return %arg1, %c0_i32 : i32, i32
  }
  func.func @transform_2(%arg0: i32, %arg1: i32, %arg2: memref<16xi32, #tpu.memory_space<smem>>, %arg3: memref<1xi32, #tpu.memory_space<smem>>) -> (i32, i32, i32) {
    %c0_i32 = arith.constant 0 : i32
    %c0_i32_0 = arith.constant 0 : i32
    return %arg0, %arg1, %c0_i32 : i32, i32, i32
  }
}

</mosaic_0001>

<llo_original>
// kernel: tpu_custom_call.1
$region0: #{tpu_custom_call.1}
  #allocation0 [shape = 'u32[]', space=smem, size = 0x4, offset = 0x4, fixed_abs, tag = 'smem constant byte address 0x4 - core index']
  #allocation1 [shape = 'u32[72,128]{1,0:T(1,128)}', space=vmem, size = 0x9000, scoped, tag = 'internal scratch']
  #allocation2 [shape = 's32[1]{0}', space=sflag, size = 0x4, scoped, tag = 'scoped memory for tpu_custom_call.1']
  #allocation3 [shape = 'u8[512]{0}', space=smem, size = 0x200, scoped, tag = 'prefetched SMEM operand 0']
  #allocation4 [shape = 's32[1]{0:T(128)S(6)}', space=smem, size = 0x200, scoped, tag = 'prefetched SMEM operand 1']
  %s0 = inlined_call_operand.vmem [shape: s32[16], index: 0, kind: input, shape index: {}]
  %s1 = inlined_call_operand.<no memory space> [shape: s32[1], index: 1, kind: input, shape index: {}]
  %s2 = inlined_call_operand.hbm [shape: f32[32,128], index: 2, kind: input, shape index: {}]
  %s3 = inlined_call_operand.hbm [shape: f32[8,128], index: 3, kind: input, shape index: {}]
  %s4 = inlined_call_operand.hbm [shape: f32[2,8,128], index: 4, kind: output, shape index: {}]
  %s5 = sld [smem:[#allocation0]]
  $region49: #{tpu_custom_call.1} parent=0
    _
  %s7 = ssub.s32 1, %s5
  %s8 = scalar_select 0, %s7, %s5
  %s10 = sshll.u32 %s0, 4
  %s11 = int_to_ptr.vmem [resolvable:$true] %s10
  %13 = dma.vmem_to_smem %s11, 16, [#allocation3], [#allocation2]
  %14 = sst [smem:[#allocation4]] %s1
  %16 = dma.done [#allocation2], 16
  %17 = sfence
  $region1: #{tpu_custom_call.1} parent=0
    #allocation5 [shape = 'u8[16384]{0}', space=vmem, size = 0x4000, scoped, tag = 'input window, operand 2, single buffered']
    #allocation6 [shape = 's32[2]{0}', space=sflag, size = 0x8, scoped, tag = 'scoped memory for tpu_custom_call.1']
    #allocation7 [shape = 's32[2]{0}', space=sflag, size = 0x8, scoped, tag = 'scoped memory for tpu_custom_call.1']
    #allocation8 [shape = 'u8[4096]{0}', space=vmem, size = 0x1000, scoped, tag = 'input window, operand 3, single buffered']
    #allocation9 [shape = 's32[1]{0}', space=sflag, size = 0x4, scoped, tag = 'scoped memory for tpu_custom_call.1']
    #allocation10 [shape = 'u8[8192]{0}', space=vmem, size = 0x2000, scoped, tag = 'output window, operand 0']
    %18 = vsyncpa [#allocation6], 0
    %19 = vsyncpa [#allocation9], 0
    %20 = vsyncpa [#allocation7], 0
    %s21 = scalar_lea.sflag [#allocation7], 1
    %22 = vsyncpa %s21, 0
    loop: start=0, step=1, limit=4
    $region2: #{tpu_custom_call.1} parent=1 // loop_pre_header
      _
    $region3: #{tpu_custom_call.1} parent=1 // loop_header
      %s24 = sphi 0, %s28
      %p25 = scmp.ge.s32.totalorder %s24, 4
      %s31 = sphi 0, %s43
      %s32 = sphi 0, %s39
      %s33 = sphi 0, %s31
      %s34 = sphi 0, %s32
      %s35 = sphi 0, %s33
      %s36 = sphi 0, %s34
      %s44 = sphi 0, %s44
      %s46 = sphi 0, %s44
      %s47 = sphi 0, %s46
      %s61 = sphi 0, %s47
      %s67 = sphi 0, %s69
      %s70 = sphi 0, %s67
      %s71 = sphi 0, %s70
      %s87 = sphi 0, %s71
      %s95 = sphi 0, %s97
      %s98 = sphi 0, %s95
      %s99 = sphi 0, %s98
      %s115 = sphi 0, %s99
    $region4: #{tpu_custom_call.1} parent=1 // loop_header_branch
      %27 = sbr.rel (%p25) target = $region8
    $region5: #{tpu_custom_call.1} parent=1 // loop_body
      %s29 = ssub.s32 %s24, 1
      %s30 = ssub.s32 %s24, 2
      %s37 = sadd.s32 1, %s32
      %p38 = scmp.ge.s32.totalorder %s37, 1
      %s39 = scalar_select %p38, 0, %s37
      %s40 = sadd.s32 1, %s31
      %s41 = scalar_select %p38, %s40, %s31
      %p42 = scmp.ge.s32.totalorder %s41, 2
      %s43 = scalar_select %p42, 0, %s41
      %s45 = sadd.s32 %s44, 1
      %p48 = scmp.eq.s32.totalorder %s24, 1
      %p49 = scmp.ne.s32.totalorder %s44, %s46
      %p50 = scmp.eq.s32.totalorder %s24, 0
      %p51 = por %p49, %p50
      %p52 = scmp.ne.s32.totalorder %s44, %s46
      %p53 = scmp.eq.s32.totalorder %s29, 1
      %p54 = por %p52, %p53
      %p55 = scmp.ne.s32.totalorder %s46, %s47
      %p56 = scmp.eq.s32.totalorder %s29, 0
      %p57 = por %p55, %p56
      %p58 = scmp.ne.s32.totalorder %s46, %s47
      %p59 = scmp.eq.s32.totalorder %s30, 1
      %p60 = por %p58, %p59
      %p62 = scmp.ne.s32.totalorder %s47, %s61
      %p63 = scmp.eq.s32.totalorder %s30, 0
      %p64 = por %p62, %p63
      %s65 = ssub.s32 %s32, %s39
      %p66 = scmp.eq.s32.totalorder %s65, 0
      %s68 = sadd.s32 %s67, 1
      %s69 = scalar_select %p66, %s67, %s68
      %p72 = pneg %p66
      %p73 = scmp.eq.s32.totalorder %s24, 1
      %p74 = por %p72, %p73
      %p75 = scmp.ne.s32.totalorder %s67, %s70
      %p76 = scmp.eq.s32.totalorder %s24, 0
      %p77 = por %p75, %p76
      %p78 = scmp.ne.s32.totalorder %s67, %s70
      %p79 = scmp.eq.s32.totalorder %s29, 1
      %p80 = por %p78, %p79
      %p81 = scmp.ne.s32.totalorder %s70, %s71
      %p82 = scmp.eq.s32.totalorder %s29, 0
      %p83 = por %p81, %p82
      %p84 = scmp.ne.s32.totalorder %s70, %s71
      %p85 = scmp.eq.s32.totalorder %s30, 1
      %p86 = por %p84, %p85
      %p88 = scmp.ne.s32.totalorder %s71, %s87
      %p89 = scmp.eq.s32.totalorder %s30, 0
      %p90 = por %p88, %p89
      %s91 = ssub.s32 %s31, %s43
      %s92 = ssub.s32 %s32, %s39
      %s93 = sor.u32 %s91, %s92
      %p94 = scmp.eq.s32.totalorder %s93, 0
      %s96 = sadd.s32 %s95, 1
      %s97 = scalar_select %p94, %s95, %s96
      %p100 = pneg %p94
      %p101 = scmp.eq.s32.totalorder %s24, 1
      %p102 = por %p100, %p101
      %p103 = scmp.ne.s32.totalorder %s95, %s98
      %p104 = scmp.eq.s32.totalorder %s24, 0
      %p105 = por %p103, %p104
      %p106 = scmp.ne.s32.totalorder %s95, %s98
      %p107 = scmp.eq.s32.totalorder %s29, 1
      %p108 = por %p106, %p107
      %p109 = scmp.ne.s32.totalorder %s98, %s99
      %p110 = scmp.eq.s32.totalorder %s29, 0
      %p111 = por %p109, %p110
      %p112 = scmp.ne.s32.totalorder %s98, %s99
      %p113 = scmp.eq.s32.totalorder %s30, 1
      %p114 = por %p112, %p113
      %p116 = scmp.ne.s32.totalorder %s99, %s115
      %p117 = scmp.eq.s32.totalorder %s30, 0
      %p118 = por %p116, %p117
      %p119 = scmp.le.s32.totalorder 1, %s24
      %p120 = scmp.lt.s32.totalorder %s24, 3
      %p121 = pnand %p119, %p120
      %p122 = pneg %p121
      // Predicated region
      $region9: #{tpu_custom_call.1} parent=5 // pred_check
        _
      $region10: #{tpu_custom_call.1} parent=5 // pred_check_branch
        %124 = sbr.rel (%p121) target = $region12
      $region11: #{tpu_custom_call.1} parent=5 // pred_region
        %s125 = ssub.s32 %s24, 1
        // Predicated region
        $region13: #{tpu_custom_call.1} parent=11 // pred_check
          %p126 = pneg %p57
        $region14: #{tpu_custom_call.1} parent=11 // pred_check_branch
          %128 = sbr.rel (%p126) target = $region16
        $region15: #{tpu_custom_call.1} parent=11 // pred_region
          %130 = vsyncadd [#allocation6], 0
          %s131 = sshll.u32 %s2, 4
          %s132 = int_to_ptr.hbm [resolvable:$true] %s131
          %s133 = sshll.u32 [#allocation5], 4
          %s134 = int_to_ptr.vmem [resolvable:$true] %s133
          %139 = dma.hbm_to_vmem [thread:$0]  %s132, 512, %s134, [#allocation6], 128, 128, 8
        $region16: #{tpu_custom_call.1} parent=11 // pred_fallthru
          _
        // Predicated region
        $region17: #{tpu_custom_call.1} parent=11 // pred_check
          %p140 = pneg %p83
        $region18: #{tpu_custom_call.1} parent=11 // pred_check_branch
          %142 = sbr.rel (%p140) target = $region20
        $region19: #{tpu_custom_call.1} parent=11 // pred_region
          %144 = vsyncadd [#allocation9], 0
          %s145 = smul.addr %s34, 8
          %s146 = scalar_lea.hbm %s3, %s145
          %s148 = sshll.u32 %s146, 4
          %s149 = int_to_ptr.hbm [resolvable:$true] %s148
          %s150 = sshll.u32 [#allocation8], 4
          %s151 = int_to_ptr.vmem [resolvable:$true] %s150
          %153 = dma.hbm_to_vmem [thread:$0]  %s149, 128, %s151, [#allocation9]
        $region20: #{tpu_custom_call.1} parent=11 // pred_fallthru
          _
      $region12: #{tpu_custom_call.1} parent=5 // pred_fallthru
        _
      %p154 = scmp.lt.s32.totalorder %s24, 2
      // Predicated region
      $region21: #{tpu_custom_call.1} parent=5 // pred_check
        %p155 = pneg %p154
      $region22: #{tpu_custom_call.1} parent=5 // pred_check_branch
        %157 = sbr.rel (%p155) target = $region24
      $region23: #{tpu_custom_call.1} parent=5 // pred_region
        _
      $region24: #{tpu_custom_call.1} parent=5 // pred_fallthru
        _
      %p158 = scmp.le.s32.totalorder 1, %s24
      %p159 = scmp.lt.s32.totalorder %s24, 3
      %p160 = pnand %p158, %p159
      %p161 = pneg %p160
      // Predicated region
      $region25: #{tpu_custom_call.1} parent=5 // pred_check
        _
      $region26: #{tpu_custom_call.1} parent=5 // pred_check_branch
        %163 = sbr.rel (%p160) target = $region28
      $region27: #{tpu_custom_call.1} parent=5 // pred_region
        %s164 = ssub.s32 %s24, 1
        // Predicated region
        $region29: #{tpu_custom_call.1} parent=27 // pred_check
          %p165 = pneg %p57
        $region30: #{tpu_custom_call.1} parent=27 // pred_check_branch
          %167 = sbr.rel (%p165) target = $region32
        $region31: #{tpu_custom_call.1} parent=27 // pred_region
          %169 = dma.done [#allocation6], 512
        $region32: #{tpu_custom_call.1} parent=27 // pred_fallthru
          _
        // Predicated region
        $region33: #{tpu_custom_call.1} parent=27 // pred_check
          %p170 = pneg %p83
        $region34: #{tpu_custom_call.1} parent=27 // pred_check_branch
          %172 = sbr.rel (%p170) target = $region36
        $region35: #{tpu_custom_call.1} parent=27 // pred_region
          %174 = dma.done [#allocation9], 128
        $region36: #{tpu_custom_call.1} parent=27 // pred_fallthru
          _
        %p175 = pneg %p57
        %p176 = pneg %p54
        %p177 = pneg %p83
        %p178 = pneg %p80
        %p179 = pneg %p111
        %p180 = pneg %p108
        %s181 = sand.u32 %s98, 1
        %s182 = scalar_lea.sflag [#allocation7], %s181
        %s183 = sand.u32 %s98, 1
        %s184 = smul.addr %s183, 8
        %s185 = scalar_lea.vmem [#allocation10], %s184
        %s186 = smul.u32 %s33, 8
        %s187 = smul.u32 %s34, 8
        %s188 = sadd.s32 %s186, %s187
        %s189 = sld [smem:[#allocation3 + %s188]]
        %s190 = scalar_lea.vmem [#allocation5], %s189
        %v191 = vld [vmem:[%s190] sm:$0x1]
        %s192 = sadd.s32 %s188, 1
        %s193 = sld [smem:[#allocation3 + %s192]]
        %s194 = scalar_lea.vmem [#allocation5], %s193
        %v195 = vld [vmem:[%s194] sm:$0x1]
        %s196 = sadd.s32 %s188, 2
        %s197 = sld [smem:[#allocation3 + %s196]]
        %s198 = scalar_lea.vmem [#allocation5], %s197
        %v199 = vld [vmem:[%s198] sm:$0x1]
        %s200 = sadd.s32 %s188, 3
        %s201 = sld [smem:[#allocation3 + %s200]]
        %s202 = scalar_lea.vmem [#allocation5], %s201
        %v203 = vld [vmem:[%s202] sm:$0x1]
        %s204 = sadd.s32 %s188, 4
        %s205 = sld [smem:[#allocation3 + %s204]]
        %s206 = scalar_lea.vmem [#allocation5], %s205
        %v207 = vld [vmem:[%s206] sm:$0x1]
        %s208 = sadd.s32 %s188, 5
        %s209 = sld [smem:[#allocation3 + %s208]]
        %s210 = scalar_lea.vmem [#allocation5], %s209
        %v211 = vld [vmem:[%s210] sm:$0x1]
        %s212 = sadd.s32 %s188, 6
        %s213 = sld [smem:[#allocation3 + %s212]]
        %s214 = scalar_lea.vmem [#allocation5], %s213
        %v215 = vld [vmem:[%s214] sm:$0x1]
        %s216 = sadd.s32 %s188, 7
        %s217 = sld [smem:[#allocation3 + %s216]]
        %s218 = scalar_lea.vmem [#allocation5], %s217
        %v219 = vld [vmem:[%s218] sm:$0x1]
        %v221 = vrot.slane %v195, 7
        %v224 = vrot.slane %v199, 6
        %v227 = vrot.slane %v203, 5
        %v230 = vrot.slane %v207, 4
        %v233 = vrot.slane %v211, 3
        %v236 = vrot.slane %v215, 2
        %v239 = vrot.slane %v219, 1
        %vm241 = vcmask 1040384
        %v242 = vsel %vm241, %v191, %v221
        %vm243 = vcmask 1041408
        %v244 = vsel %vm243, %v242, %v224
        %vm245 = vcmask 1042432
        %v246 = vsel %vm245, %v244, %v227
        %vm247 = vcmask 1043456
        %v248 = vsel %vm247, %v246, %v230
        %vm249 = vcmask 1044480
        %v250 = vsel %vm249, %v248, %v233
        %vm251 = vcmask 1045504
        %v252 = vsel %vm251, %v250, %v236
        %vm253 = vcmask 1046528
        %v254 = vsel %vm253, %v252, %v239
        %v255 = vld [vmem:[#allocation8] sm:$0xff]
        %v256 = vadd.f32 %v254, %v255
        %257 = vst [vmem:[%s185] sm:$0xff] %v256
        %s258 = sand.u32 %s98, 1
        %s259 = scalar_lea.sflag [#allocation7], %s258
        %s260 = sand.u32 %s98, 1
        %s261 = smul.addr %s260, 8
        %s262 = scalar_lea.vmem [#allocation10], %s261
        // Predicated region
        $region37: #{tpu_custom_call.1} parent=27 // pred_check
          %p263 = pneg %p108
        $region38: #{tpu_custom_call.1} parent=27 // pred_check_branch
          %265 = sbr.rel (%p263) target = $region40
        $region39: #{tpu_custom_call.1} parent=27 // pred_region
          %267 = vsyncadd %s259, 0
          %s268 = sadd.s32 %s34, %s33
          %s269 = smul.addr %s268, 8
          %s270 = scalar_lea.hbm %s4, %s269
          %s272 = sshll.u32 %s262, 4
          %s273 = int_to_ptr.vmem [resolvable:$true] %s272
          %s274 = sshll.u32 %s270, 4
          %s275 = int_to_ptr.hbm [resolvable:$true] %s274
          %277 = dma.vmem_to_hbm [thread:$0]  %s273, 128, %s275, %s259
        $region40: #{tpu_custom_call.1} parent=27 // pred_fallthru
          _
      $region28: #{tpu_custom_call.1} parent=5 // pred_fallthru
        _
      %p278 = scmp.le.s32.totalorder 2, %s24
      // Predicated region
      $region41: #{tpu_custom_call.1} parent=5 // pred_check
        %p279 = pneg %p278
      $region42: #{tpu_custom_call.1} parent=5 // pred_check_branch
        %281 = sbr.rel (%p279) target = $region44
      $region43: #{tpu_custom_call.1} parent=5 // pred_region
        %s282 = ssub.s32 %s24, 2
        // Predicated region
        $region45: #{tpu_custom_call.1} parent=43 // pred_check
          %p283 = pneg %p114
        $region46: #{tpu_custom_call.1} parent=43 // pred_check_branch
          %285 = sbr.rel (%p283) target = $region48
        $region47: #{tpu_custom_call.1} parent=43 // pred_region
          %s286 = sand.u32 %s99, 1
          %s287 = scalar_lea.sflag [#allocation7], %s286
          %s288 = sand.u32 %s99, 1
          %s289 = smul.addr %s288, 8
          %s290 = scalar_lea.vmem [#allocation10], %s289
          %292 = dma.done %s287, 128
        $region48: #{tpu_custom_call.1} parent=43 // pred_fallthru
          _
      $region44: #{tpu_custom_call.1} parent=5 // pred_fallthru
        _
    $region6: #{tpu_custom_call.1} parent=1 // loop_footer
      %s28 = sadd.s32 1, %s24
    $region7: #{tpu_custom_call.1} parent=1 // loop_footer_branch
      %23 = sbr.rel target = $region3
    $region8: #{tpu_custom_call.1} parent=1 // loop_exit
      _
    %293 = vsyncpa [#allocation6], 1
    %s294 = scalar_lea.sflag [#allocation6], 1
    %295 = vsyncpa %s294, 1
    %296 = vsyncpa [#allocation9], 1
    %297 = vsyncpa [#allocation7], 1
    %s298 = scalar_lea.sflag [#allocation7], 1
    %299 = vsyncpa %s298, 1

</llo_original>
